<compile_context>
chip_gen: v7x
topology: tpu7x:2x2x1
jax: 0.10.0
libtpu: 0.0.40
codegen_flags: <defaults>
</compile_context>

<pallas_src>
import jax
import jax.numpy as jnp
from jax.experimental import pallas as pl
from jax.experimental.pallas import tpu as pltpu


def _texual_kernel(len_ref,      # VMEM (TB, 1) int32   clamped per-row lengths
                   feat_ref,     # VMEM (K, TB, D)      token-major gathered top-k features
                   wf_ref,       # VMEM (D, E + H)      [w_lin(fp16-rounded) | w1 * bn_scale]
                   bf_ref,       # VMEM (1, E + H)      [b_lin(fp16-rounded) | b1*bn_scale + bn_shift]
                   w2_ref,       # VMEM (H, E)          MLP last Linear
                   b2_ref,       # VMEM (1, E)
                   out_ref):     # VMEM (TB, E)         pooled output
    K, TB, D = feat_ref.shape
    E = out_ref.shape[-1]

    # Token-major: merging the two leading dims keeps the trailing (lane) dim,
    # so the MXU sees one big (K*TB, D) LHS without an in-kernel relayout.
    x = feat_ref[...].reshape(K * TB, D)

    # l2norm(X, dim=-1, eps=1e-8): norm = sqrt(sum(x^2)) + eps ; x / norm.
    ssq = jnp.sum(x * x, axis=-1, keepdims=True)
    norm = jnp.sqrt(ssq) + 1e-8
    xn = x * pl.reciprocal(norm, approx=True)      # EUP reciprocal (otherwise idle slot)

    # One fused MXU push: [cap_pre | hidden_pre] = xn @ [W_lin | W1'] + [b_lin | b1'].
    fused = jnp.dot(xn, wf_ref[...], preferred_element_type=jnp.float32) + bf_ref[0, :]
    cap = fused[:, :E]                             # cap_emb = linear(features.half()) path
    h = jnp.maximum(fused[:, E:], 0.0)             # ReLU(BN(Linear)) with BN folded into W1'/b1'

    y = jnp.dot(h, w2_ref[...], preferred_element_type=jnp.float32) + b2_ref[0, :]
    feats = (y + cap).reshape(K, TB, E)            # mlp(features) + cap_emb  (token-major)

    # maxk_pool1d_var(x, dim=1, k=1, lengths): max over first `length` tokens per row.
    lens = len_ref[...]                                            # (TB, 1) int32
    tok = jax.lax.broadcasted_iota(jnp.int32, (K, TB, 1), 0)       # token index per slab
    valid = tok < lens[None, :, :]                                 # (K, TB, 1)
    masked = jnp.where(valid, feats, -jnp.inf)
    out_ref[...] = jnp.max(masked, axis=0)         # elementwise max over K slabs (VPU)


def init_params(key, input_dim, embed_dim):
    hidden = embed_dim // 2
    ks = jax.random.split(key, 8)
    p = {
        "w_lin": 0.02 * jax.random.normal(ks[0], (input_dim, embed_dim), jnp.float32),
        "b_lin": 0.02 * jax.random.normal(ks[1], (embed_dim,), jnp.float32),
        "w1":    0.02 * jax.random.normal(ks[2], (input_dim, hidden), jnp.float32),
        "b1":    0.02 * jax.random.normal(ks[3], (hidden,), jnp.float32),
        "gamma1": 1.0 + 0.1 * jax.random.normal(ks[4], (hidden,), jnp.float32),
        "beta1":  0.1 * jax.random.normal(ks[5], (hidden,), jnp.float32),
        "rm1":   jnp.zeros((hidden,), jnp.float32),   # BatchNorm running mean
        "rv1":   jnp.ones((hidden,), jnp.float32),    # BatchNorm running var
        "w2":    0.02 * jax.random.normal(ks[6], (hidden, embed_dim), jnp.float32),
        "b2":    0.02 * jax.random.normal(ks[7], (embed_dim,), jnp.float32),
    }
    return p


def prepare_params(params, bn_eps=1e-5):
    """One-time weight prep (hoisted out of the forward):
       - fold eval-mode BatchNorm1d into the first MLP Linear,
       - emulate the fp16 weights of self.linear (features.half() path),
       - fuse w_lin and the folded w1 into a single (D, E+H) RHS."""
    s1 = params["gamma1"] / jnp.sqrt(params["rv1"] + bn_eps)
    t1 = params["beta1"] - params["rm1"] * s1
    w1f = params["w1"] * s1[None, :]
    b1f = params["b1"] * s1 + t1

    # TODO(synk): the reference computes self.linear(features.half()) fully in fp16
    # (fp16 activations + fp16 accumulation); the TPU MXU has no fp16 path, so only
    # the weights/bias are fp16-rounded here and the matmul accumulates in f32.
    w_lin = params["w_lin"].astype(jnp.float16).astype(jnp.float32)
    b_lin = params["b_lin"].astype(jnp.float16).astype(jnp.float32)

    E = params["w_lin"].shape[1]
    H = params["w1"].shape[1]
    return {
        "w_fused": jnp.concatenate([w_lin, w1f], axis=1),              # (D, E+H)
        "b_fused": jnp.concatenate([b_lin, b1f]).reshape(1, E + H),    # (1, E+H)
        "w2": params["w2"],                                            # (H, E)
        "b2": params["b2"].reshape(1, E),                              # (1, E)
        "embed_dim": E,
        "hidden_dim": H,
    }


def _choose_batch_tile(bs, k, d, e, h, target_rows=256, vmem_budget=24 << 20):
    """Pick TB so TB*k fills the MXU M-dim (~256 rows) while keeping the f32
       intermediates (xn, fused, cap/h, y) inside a conservative VMEM budget and
       (TB, *) blocks sublane-aligned (TB == padded batch or TB % 8 == 0)."""
    bytes_per_row = 4 * (d + 2 * (e + h) + e)             # rough f32 live-temp bytes / token row
    max_rows_vmem = max(8, vmem_budget // max(bytes_per_row, 1))
    rows = min(target_rows, max_rows_vmem)
    tb = max(1, rows // max(k, 1))
    if tb >= bs:
        return bs, bs
    tb = max(8, (tb // 8) * 8)
    b_pad = ((bs + tb - 1) // tb) * tb
    return tb, b_pad


def texual_embedding_forward(prep, features, text, atten, ratio=0.3):
    bs, L, D = features.shape
    E = prep["embed_dim"]
    H = prep["hidden_dim"]

    # ---- plain-JAX glue: mask / lengths / attention row select / top-k gather ----
    mask = (text != 0).astype(features.dtype)                 # (B, L)
    lengths = jnp.sum(mask, axis=1).astype(jnp.int32) - 2     # (B,)
    k = int((atten.shape[1] - 2) * ratio)
    eot = jnp.argmax(text, axis=-1)                           # (B,)
    barange = jnp.arange(bs)

    # atten[b,:,eot]=-1 ; atten[b,:,0]=-1 ; atten = atten[b, eot, :] ; atten *= mask
    row = atten[barange, eot, :]                              # (B, L)
    row = row.at[barange, eot].set(-1.0)
    row = row.at[:, 0].set(-1.0)
    row = row * mask        # matches the reference (padding positions score 0 before top_k)

    _, idx = jax.lax.top_k(row, k)                            # (B, k)

    # Gather directly into TOKEN-MAJOR layout (k, B, D): feats_tm[t, b] = features[b, idx[b, t]].
    # TODO(synk): the gather could move inside the kernel (scalar-prefetched idx + manual DMA
    # gather) to avoid one HBM round-trip of (B, k, D); kept in plain JAX for robust lowering.
    feats_tm = features[barange[None, :], idx.T]              # (k, B, D)

    # lengths[i] if lengths[i] < k else k; clamp to >= 1 so a degenerate (empty)
    # caption does not turn the whole pooled row into -inf (the reference NaNs there).
    lengths_c = jnp.maximum(jnp.minimum(lengths, k), 1).astype(jnp.int32)

    # ---- batch-tile the grid so each step fills the MXU M-dim ----
    TB, B_pad = _choose_batch_tile(bs, k, D, E, H)
    if B_pad > bs:
        feats_tm = jnp.pad(feats_tm, ((0, 0), (0, B_pad - bs), (0, 0)))
        lengths_c = jnp.pad(lengths_c, (0, B_pad - bs), constant_values=1)
    lengths_2d = lengths_c.reshape(B_pad, 1)

    grid_spec = pltpu.PrefetchScalarGridSpec(
        num_scalar_prefetch=0,
        grid=(B_pad // TB,),
        in_specs=[
            pl.BlockSpec((TB, 1), lambda i: (i, 0)),          # lengths
            pl.BlockSpec((k, TB, D), lambda i: (0, i, 0)),    # token-major gathered features
            pl.BlockSpec((D, E + H), lambda i: (0, 0)),       # fused [w_lin | w1']  (resident)
            pl.BlockSpec((1, E + H), lambda i: (0, 0)),       # fused [b_lin | b1']
            pl.BlockSpec((H, E), lambda i: (0, 0)),           # w2
            pl.BlockSpec((1, E), lambda i: (0, 0)),           # b2
        ],
        out_specs=pl.BlockSpec((TB, E), lambda i: (i, 0)),    # lane-dense 2-D output
    )

    out = pl.pallas_call(
        _texual_kernel,
        out_shape=jax.ShapeDtypeStruct((B_pad, E), jnp.float32),
        grid_spec=grid_spec,
        compiler_params=pltpu.CompilerParams(
            dimension_semantics=("parallel",)),               # batch tiles are independent
    )(lengths_2d, feats_tm, prep["w_fused"], prep["b_fused"], prep["w2"], prep["b2"])

    return out[:bs].astype(jnp.float32)


if __name__ == "__main__":
    key = jax.random.PRNGKey(0)
    bs, L, D, E = 2, 16, 32, 64          # input_dim=32, embed_dim=64, seq=16
    k_feat, k_att, k_par = jax.random.split(key, 3)

    features = jax.random.normal(k_feat, (bs, L, D), jnp.float32)
    atten = jax.random.normal(k_att, (bs, L, L), jnp.float32)

    # token ids: nonzero prefix, EOT token has the largest id, zero padding
    text = jnp.zeros((bs, L), jnp.int32)
    text = text.at[0, :8].set(jnp.array([3, 10, 11, 12, 13, 14, 15, 100], jnp.int32))
    text = text.at[1, :4].set(jnp.array([3, 20, 21, 200], jnp.int32))

    params = init_params(k_par, D, E)
    prep = prepare_params(params)        # one-time: BN fold, fp16 rounding, weight fusion

    out = texual_embedding_forward(prep, features, text, atten, ratio=0.3)
    out = jax.block_until_ready(out)

    assert out.shape == (bs, E), out.shape
    assert out.dtype == jnp.float32
    assert bool(jnp.all(jnp.isfinite(out)))
    print("KERNEL_OK")
</pallas_src>

<mosaic_0001>
module attributes {stable_mosaic.version = 11 : i64} {
  func.func @_texual_kernel(%arg0: i32, %arg1: memref<2x1xi32, #tpu.memory_space<vmem>>, %arg2: memref<4x2x32xf32, #tpu.memory_space<vmem>>, %arg3: memref<32x96xf32, #tpu.memory_space<vmem>>, %arg4: memref<1x96xf32, #tpu.memory_space<vmem>>, %arg5: memref<32x64xf32, #tpu.memory_space<vmem>>, %arg6: memref<1x64xf32, #tpu.memory_space<vmem>>, %arg7: memref<2x64xf32, #tpu.memory_space<vmem>>) attributes {dimension_semantics = [#tpu.dimension_semantics<parallel>], iteration_bounds = array<i64: 1>, scalar_prefetch = 0 : i64, scratch_operands = 0 : i64, tpu.core_type = #tpu.core_type<tc>, window_params = [{transform_indices = @transform_0, window_bounds = array<i64: 2, 1>}, {transform_indices = @transform_1, window_bounds = array<i64: 4, 2, 32>}, {pipeline_mode = #tpu.pipeline_mode<synchronous>, transform_indices = @transform_2, window_bounds = array<i64: 32, 96>}, {pipeline_mode = #tpu.pipeline_mode<synchronous>, transform_indices = @transform_3, window_bounds = array<i64: 1, 96>}, {pipeline_mode = #tpu.pipeline_mode<synchronous>, transform_indices = @transform_4, window_bounds = array<i64: 32, 64>}, {pipeline_mode = #tpu.pipeline_mode<synchronous>, transform_indices = @transform_5, window_bounds = array<i64: 1, 64>}, {transform_indices = @transform_6, window_bounds = array<i64: 2, 64>}]} {
    %c0 = arith.constant 0 : index
    %c0_0 = arith.constant 0 : index
    %c0_1 = arith.constant 0 : index
    %0 = vector.load %arg2[%c0, %c0_0, %c0_1] : memref<4x2x32xf32, #tpu.memory_space<vmem>>, vector<4x2x32xf32>
    %1 = vector.shape_cast %0 : vector<4x2x32xf32> to vector<8x32xf32>
    %2 = arith.mulf %1, %1 : vector<8x32xf32>
    %cst = arith.constant dense<0.000000e+00> : vector<8xf32>
    %3 = vector.multi_reduction <add>, %2, %cst [1] : vector<8x32xf32> to vector<8xf32>
    %4 = vector.shape_cast %3 : vector<8xf32> to vector<8x1xf32>
    %5 = math.sqrt %4 : vector<8x1xf32>
    %cst_2 = arith.constant 9.99999993E-9 : f32
    %6 = vector.broadcast %cst_2 : f32 to vector<8x1xf32>
    %7 = arith.addf %5, %6 : vector<8x1xf32>
    %8 = tpu.reciprocal %7 {approx = true} : vector<8x1xf32> -> vector<8x1xf32>
    %9 = vector.broadcast %8 : vector<8x1xf32> to vector<8x32xf32>
    %10 = arith.mulf %1, %9 : vector<8x32xf32>
    %c0_3 = arith.constant 0 : index
    %c0_4 = arith.constant 0 : index
    %11 = vector.load %arg3[%c0_3, %c0_4] : memref<32x96xf32, #tpu.memory_space<vmem>>, vector<32x96xf32>
    %cst_5 = arith.constant dense<0.000000e+00> : vector<8x96xf32>
    %12 = tpu.matmul %10, %11, %cst_5 {dimension_numbers = #tpu.dot_dimension_numbers<[1], [0], [0], [1], [0, 0, 1, 1], [], []>} : vector<8x32xf32>, vector<32x96xf32>, vector<8x96xf32> -> vector<8x96xf32>
    %c0_6 = arith.constant 0 : index
    %c0_7 = arith.constant 0 : index
    %13 = vector.load %arg4[%c0_6, %c0_7] : memref<1x96xf32, #tpu.memory_space<vmem>>, vector<1x96xf32>
    %14 = vector.shape_cast %13 : vector<1x96xf32> to vector<96xf32>
    %15 = vector.shape_cast %14 : vector<96xf32> to vector<1x96xf32>
    %16 = vector.broadcast %15 : vector<1x96xf32> to vector<8x96xf32>
    %17 = arith.addf %12, %16 : vector<8x96xf32>
    %18 = vector.extract_strided_slice %17 {offsets = [0, 0], sizes = [8, 64], strides = [1, 1]} : vector<8x96xf32> to vector<8x64xf32>
    %19 = vector.extract_strided_slice %17 {offsets = [0, 64], sizes = [8, 32], strides = [1, 1]} : vector<8x96xf32> to vector<8x32xf32>
    %cst_8 = arith.constant 0.000000e+00 : f32
    %20 = vector.broadcast %cst_8 : f32 to vector<8x32xf32>
    %21 = arith.maximumf %19, %20 : vector<8x32xf32>
    %c0_9 = arith.constant 0 : index
    %c0_10 = arith.constant 0 : index
    %22 = vector.load %arg5[%c0_9, %c0_10] : memref<32x64xf32, #tpu.memory_space<vmem>>, vector<32x64xf32>
    %cst_11 = arith.constant dense<0.000000e+00> : vector<8x64xf32>
    %23 = tpu.matmul %21, %22, %cst_11 {dimension_numbers = #tpu.dot_dimension_numbers<[1], [0], [0], [1], [0, 0, 1, 1], [], []>} : vector<8x32xf32>, vector<32x64xf32>, vector<8x64xf32> -> vector<8x64xf32>
    %c0_12 = arith.constant 0 : index
    %c0_13 = arith.constant 0 : index
    %24 = vector.load %arg6[%c0_12, %c0_13] : memref<1x64xf32, #tpu.memory_space<vmem>>, vector<1x64xf32>
    %25 = vector.shape_cast %24 : vector<1x64xf32> to vector<64xf32>
    %26 = vector.shape_cast %25 : vector<64xf32> to vector<1x64xf32>
    %27 = vector.broadcast %26 : vector<1x64xf32> to vector<8x64xf32>
    %28 = arith.addf %23, %27 : vector<8x64xf32>
    %29 = arith.addf %28, %18 : vector<8x64xf32>
    %30 = vector.shape_cast %29 : vector<8x64xf32> to vector<4x2x64xf32>
    %c0_14 = arith.constant 0 : index
    %c0_15 = arith.constant 0 : index
    %31 = vector.load %arg1[%c0_14, %c0_15] : memref<2x1xi32, #tpu.memory_space<vmem>>, vector<2x1xi32>
    %32 = tpu.iota {dimensions = array<i32: 0>} : vector<4x2x1xi32>
    %33 = vector.shape_cast %31 : vector<2x1xi32> to vector<1x2x1xi32>
    %34 = vector.broadcast %33 : vector<1x2x1xi32> to vector<4x2x1xi32>
    %35 = arith.cmpi slt, %32, %34 : vector<4x2x1xi32>
    %cst_16 = arith.constant 0xFF800000 : f32
    %36 = vector.shape_cast %35 : vector<4x2x1xi1> to vector<4x2x1xi1>
    %37 = vector.broadcast %36 : vector<4x2x1xi1> to vector<4x2x64xi1>
    %38 = vector.broadcast %cst_16 : f32 to vector<4x2x64xf32>
    %39 = arith.select %37, %30, %38 : vector<4x2x64xi1>, vector<4x2x64xf32>
    %cst_17 = arith.constant dense<0xFF800000> : vector<2x64xf32>
    %40 = vector.multi_reduction <maximumf>, %39, %cst_17 [0] : vector<4x2x64xf32> to vector<2x64xf32>
    %c0_18 = arith.constant 0 : index
    %c0_19 = arith.constant 0 : index
    %41 = vector.load %arg7[%c0_18, %c0_19] : memref<2x64xf32, #tpu.memory_space<vmem>>, vector<2x64xf32>
    tpu.vector_store %arg7[%c0_18, %c0_19], %40 {strides = array<i32>} : memref<2x64xf32, #tpu.memory_space<vmem>>, vector<2x64xf32>,
    return
  }
  func.func @transform_0(%arg0: i32) -> (i32, i32) {
    %c0_i32 = arith.constant 0 : i32
    %c0_i32_0 = arith.constant 0 : i32
    return %arg0, %c0_i32 : i32, i32
  }
  func.func @transform_1(%arg0: i32) -> (i32, i32, i32) {
    %c0_i32 = arith.constant 0 : i32
    %c0_i32_0 = arith.constant 0 : i32
    %c0_i32_1 = arith.constant 0 : i32
    return %c0_i32, %arg0, %c0_i32_0 : i32, i32, i32
  }
  func.func @transform_2(%arg0: i32) -> (i32, i32) {
    %c0_i32 = arith.constant 0 : i32
    %c0_i32_0 = arith.constant 0 : i32
    %c0_i32_1 = arith.constant 0 : i32
    return %c0_i32, %c0_i32_0 : i32, i32
  }
  func.func @transform_3(%arg0: i32) -> (i32, i32) {
    %c0_i32 = arith.constant 0 : i32
    %c0_i32_0 = arith.constant 0 : i32
    %c0_i32_1 = arith.constant 0 : i32
    return %c0_i32, %c0_i32_0 : i32, i32
  }
  func.func @transform_4(%arg0: i32) -> (i32, i32) {
    %c0_i32 = arith.constant 0 : i32
    %c0_i32_0 = arith.constant 0 : i32
    %c0_i32_1 = arith.constant 0 : i32
    return %c0_i32, %c0_i32_0 : i32, i32
  }
  func.func @transform_5(%arg0: i32) -> (i32, i32) {
    %c0_i32 = arith.constant 0 : i32
    %c0_i32_0 = arith.constant 0 : i32
    %c0_i32_1 = arith.constant 0 : i32
    return %c0_i32, %c0_i32_0 : i32, i32
  }
  func.func @transform_6(%arg0: i32) -> (i32, i32) {
    %c0_i32 = arith.constant 0 : i32
    %c0_i32_0 = arith.constant 0 : i32
    return %arg0, %c0_i32 : i32, i32
  }
}

</mosaic_0001>

<llo_original>
// kernel: tpu_custom_call.1
$region0: #{tpu_custom_call.1}
  #allocation0 [shape = 'u32[]', space=smem, size = 0x4, offset = 0x4, fixed_abs, tag = 'smem constant byte address 0x4 - core index']
  #allocation1 [shape = 'u32[144,128]{1,0:T(1,128)}', space=vmem, size = 0x12000, scoped, tag = 'internal scratch']
  %s0 = inlined_call_operand.vmem [shape: s32[2,1], index: 0, kind: input, shape index: {}]
  %s1 = inlined_call_operand.hbm [shape: f32[4,2,32], index: 1, kind: input, shape index: {}]
  %s2 = inlined_call_operand.hbm [shape: f32[32,96], index: 2, kind: input, shape index: {}]
  %s3 = inlined_call_operand.vmem [shape: f32[1,96], index: 3, kind: input, shape index: {}]
  %s4 = inlined_call_operand.hbm [shape: f32[32,64], index: 4, kind: input, shape index: {}]
  %s5 = inlined_call_operand.vmem [shape: f32[1,64], index: 5, kind: input, shape index: {}]
  %s6 = inlined_call_operand.hbm [shape: f32[2,64], index: 6, kind: output, shape index: {}]
  %s7 = sld [smem:[#allocation0]]
  $region46: #{tpu_custom_call.1} parent=0
    _
  %s9 = ssub.s32 1, %s7
  %s10 = scalar_select 0, %s9, %s7
  $region1: #{tpu_custom_call.1} parent=0
    #allocation2 [shape = 'u8[4096]{0}', space=vmem, size = 0x1000, scoped, tag = 'input window, operand 1, single buffered']
    #allocation3 [shape = 's32[1]{0}', space=sflag, size = 0x4, scoped, tag = 'scoped memory for tpu_custom_call.1']
    #allocation4 [shape = 's32[1]{0}', space=sflag, size = 0x4, scoped, tag = 'scoped memory for tpu_custom_call.1']
    #allocation5 [shape = 'u8[16384]{0}', space=vmem, size = 0x4000, scoped, tag = 'input window, operand 2, single buffered']
    #allocation6 [shape = 's32[1]{0}', space=sflag, size = 0x4, scoped, tag = 'scoped memory for tpu_custom_call.1']
    #allocation7 [shape = 'u8[16384]{0}', space=vmem, size = 0x4000, scoped, tag = 'input window, operand 4, single buffered']
    #allocation8 [shape = 'u8[1024]{0}', space=vmem, size = 0x400, scoped, tag = 'output window, operand 0, single buffered']
    %11 = vsyncpa [#allocation3], 0
    %12 = vsyncpa [#allocation6], 0
    %13 = vsyncpa [#allocation4], 0
    // Predicated region
    $region2: #{tpu_custom_call.1} parent=1 // pred_check
      _
    $region3: #{tpu_custom_call.1} parent=1 // pred_check_branch
      %15 = sbr.rel (0) target = $region5
    $region4: #{tpu_custom_call.1} parent=1 // pred_region
      _
    $region5: #{tpu_custom_call.1} parent=1 // pred_fallthru
      _
    // Predicated region
    $region6: #{tpu_custom_call.1} parent=1 // pred_check
      _
    $region7: #{tpu_custom_call.1} parent=1 // pred_check_branch
      %17 = sbr.rel (0) target = $region9
    $region8: #{tpu_custom_call.1} parent=1 // pred_region
      %s19 = ssub.s32 128, 128
      %20 = vsyncadd [#allocation3], %s19
      %s21 = sshll.u32 [#allocation2], 4
      %s22 = int_to_ptr.vmem [resolvable:$true] %s21
      %27 = dma.hbm_to_vmem [thread:$0]  %s1, 128, %s22, [#allocation3], 32, 32, 2
    $region9: #{tpu_custom_call.1} parent=1 // pred_fallthru
      _
    // Predicated region
    $region10: #{tpu_custom_call.1} parent=1 // pred_check
      _
    $region11: #{tpu_custom_call.1} parent=1 // pred_check_branch
      %29 = sbr.rel (0) target = $region13
    $region12: #{tpu_custom_call.1} parent=1 // pred_region
      %s31 = ssub.s32 512, 512
      %32 = vsyncadd [#allocation6], %s31
      %s33 = sshll.u32 [#allocation5], 4
      %s34 = int_to_ptr.vmem [resolvable:$true] %s33
      %39 = dma.hbm_to_vmem [thread:$0]  %s2, 512, %s34, [#allocation6], 128, 128, 8
    $region13: #{tpu_custom_call.1} parent=1 // pred_fallthru
      _
    // Predicated region
    $region14: #{tpu_custom_call.1} parent=1 // pred_check
      _
    $region15: #{tpu_custom_call.1} parent=1 // pred_check_branch
      %41 = sbr.rel (0) target = $region17
    $region16: #{tpu_custom_call.1} parent=1 // pred_region
      _
    $region17: #{tpu_custom_call.1} parent=1 // pred_fallthru
      _
    // Predicated region
    $region18: #{tpu_custom_call.1} parent=1 // pred_check
      _
    $region19: #{tpu_custom_call.1} parent=1 // pred_check_branch
      %43 = sbr.rel (0) target = $region21
    $region20: #{tpu_custom_call.1} parent=1 // pred_region
      %s45 = ssub.s32 512, 512
      %46 = vsyncadd [#allocation6], %s45
      %s47 = sshll.u32 [#allocation7], 4
      %s48 = int_to_ptr.vmem [resolvable:$true] %s47
      %53 = dma.hbm_to_vmem [thread:$0]  %s4, 512, %s48, [#allocation6], 128, 128, 8
    $region21: #{tpu_custom_call.1} parent=1 // pred_fallthru
      _
    // Predicated region
    $region22: #{tpu_custom_call.1} parent=1 // pred_check
      _
    $region23: #{tpu_custom_call.1} parent=1 // pred_check_branch
      %55 = sbr.rel (0) target = $region25
    $region24: #{tpu_custom_call.1} parent=1 // pred_region
      _
    $region25: #{tpu_custom_call.1} parent=1 // pred_fallthru
      _
    // Predicated region
    $region26: #{tpu_custom_call.1} parent=1 // pred_check
      _
    $region27: #{tpu_custom_call.1} parent=1 // pred_check_branch
      %57 = sbr.rel (0) target = $region29
    $region28: #{tpu_custom_call.1} parent=1 // pred_region
      %58 = dma.done [#allocation3], 128
    $region29: #{tpu_custom_call.1} parent=1 // pred_fallthru
      _
    // Predicated region
    $region30: #{tpu_custom_call.1} parent=1 // pred_check
      _
    $region31: #{tpu_custom_call.1} parent=1 // pred_check_branch
      %60 = sbr.rel (0) target = $region33
    $region32: #{tpu_custom_call.1} parent=1 // pred_region
      %61 = dma.done [#allocation6], 512
    $region33: #{tpu_custom_call.1} parent=1 // pred_fallthru
      _
    // Predicated region
    $region34: #{tpu_custom_call.1} parent=1 // pred_check
      _
    $region35: #{tpu_custom_call.1} parent=1 // pred_check_branch
      %63 = sbr.rel (0) target = $region37
    $region36: #{tpu_custom_call.1} parent=1 // pred_region
      %64 = dma.done [#allocation6], 512
    $region37: #{tpu_custom_call.1} parent=1 // pred_fallthru
      _
    %v65 = vld [vmem:[#allocation2] sm:$0x3]
    %v66 = vld [vmem:[#allocation2 + $0x2] sm:$0x3]
    %v67 = vld [vmem:[#allocation2 + $0x4] sm:$0x3]
    %v68 = vld [vmem:[#allocation2 + $0x6] sm:$0x3]
    %v69 = vmul.f32 %v65, %v65
    %v70 = vmul.f32 %v66, %v66
    %v71 = vmul.f32 %v67, %v67
    %v72 = vmul.f32 %v68, %v68
    %v77 = vcombine.low %v69, %v70
    %v78 = vcombine.low %v71, %v72
    %v80 = vunpack.c.l.s4 1983009808
    %v81 = vunpack.c.0.s8 %v80
    %v82 = vlaneseq
    %v83 = vshrl.u32 %v82, 7
    %v84 = vsub.s32 %v81, %v83
    %v85 = vrot.slane %v77, %v84
    %v87 = vunpack.c.l.s4 1983009808
    %v88 = vunpack.c.0.s8 %v87
    %v89 = vlaneseq
    %v90 = vshrl.u32 %v89, 7
    %v91 = vsub.s32 %v88, %v90
    %v92 = vrot.slane %v78, %v91
    %v93 = vcombine.low %v85, %v92
    %vm95 = vcmask 261120
    %v96 = vsel %vm95, %v93, 0.0
    %97 = vadd.xlane.f32.xlu0 %v96
    %v98 = vpop.xlane.xlu0 %97
    %v99 = vrsqrt.pop %v98
    %v100 = vmul.f32 %v98, %v99
    %vm101 = vcmp.eq.f32.partialorder %v98, inf
    %v102 = vsel %vm101, %v98, %v100
    %vm103 = vcmp.eq.f32.partialorder %v98, 0.0
    %v104 = vand.u32 %v98, 2147483648
    %v105 = vsel %vm103, %v104, %v102
    %v106 = vadd.f32 %v105, 1e-08
    %v107 = vrcp.pop %v106
    %v110 = vunpack.c.l.s4 269488144
    %v111 = vunpack.c.0.s8 %v110
    %v112 = vlaneseq
    %v113 = vshrl.u32 %v112, 7
    %v114 = vsub.s32 %v111, %v113
    %v115 = vrot.slane %v107, %v114
    %v117 = vunpack.c.l.s4 842150450
    %v118 = vunpack.c.0.s8 %v117
    %v119 = vlaneseq
    %v120 = vshrl.u32 %v119, 7
    %v121 = vsub.s32 %v118, %v120
    %v122 = vrot.slane %v107, %v121
    %v124 = vunpack.c.l.s4 1414812756
    %v125 = vunpack.c.0.s8 %v124
    %v126 = vlaneseq
    %v127 = vshrl.u32 %v126, 7
    %v128 = vsub.s32 %v125, %v127
    %v129 = vrot.slane %v107, %v128
    %v131 = vunpack.c.l.s4 1987475062
    %v132 = vunpack.c.0.s8 %v131
    %v133 = vlaneseq
    %v134 = vshrl.u32 %v133, 7
    %v135 = vsub.s32 %v132, %v134
    %v136 = vrot.slane %v107, %v135
    %v141 = vmul.f32 %v65, %v115
    %v142 = vmul.f32 %v66, %v122
    %v143 = vmul.f32 %v67, %v129
    %v144 = vmul.f32 %v68, %v136
    %v145 = vld [vmem:[#allocation5] sm:$0xff]
    %v146 = vld [vmem:[#allocation5 + $0x8] sm:$0xff]
    %v147 = vld [vmem:[#allocation5 + $0x10] sm:$0xff]
    %v148 = vld [vmem:[#allocation5 + $0x18] sm:$0xff]
    %v149 = vld [vmem:[%s3] sm:$0x1]
    %v151 = vlaneseq
    %v152 = vshrl.u32 %v151, 7
    %v153 = vsub.s32 0, %v152
    %v154 = vrot.slane %v149, %v153
    %v160 = vcombine.low %v141, %v142
    %v161 = vcombine.low %v143, %v144
    %v163 = vunpack.c.l.s4 1983009808
    %v164 = vunpack.c.0.s8 %v163
    %v165 = vlaneseq
    %v166 = vshrl.u32 %v165, 7
    %v167 = vsub.s32 %v164, %v166
    %v168 = vrot.slane %v160, %v167
    %v170 = vunpack.c.l.s4 1983009808
    %v171 = vunpack.c.0.s8 %v170
    %v172 = vlaneseq
    %v173 = vshrl.u32 %v172, 7
    %v174 = vsub.s32 %v171, %v173
    %v175 = vrot.slane %v161, %v174
    %v176 = vcombine.low %v168, %v175
    %v177 = vsel %vm95, %v176, 0
    %179 = vmatprep.subr.mxu0 0.0
    %180 = vmatpush1.msra.mxu0 %v145
    %181 = vmatprep.subr.mxu0 0.0
    %182 = vmatpush1.msra.mxu0 %v146
    %183 = vmatprep.subr.mxu0 0.0
    %184 = vmatpush1.msra.mxu0 %v147
    %185 = vmatprep.subr.mxu0 0.0
    %186 = vmatpush1.msra.mxu0 %v148
    %187 = vmatprep.subr.mxu0 0.0
    %188 = vmatpush1.msra.mxu0 0.0
    %189 = vmatprep.subr.mxu0 0.0
    %190 = vmatpush1.msra.mxu0 0.0
    %191 = vmatprep.subr.mxu0 0.0
    %192 = vmatpush1.msra.mxu0 0.0
    %193 = vmatprep.subr.mxu0 0.0
    %194 = vmatpush1.msra.mxu0 0.0
    %195 = vmatprep.subr.mxu0 0.0
    %196 = vmatpush1.msra.mxu0 0.0
    %197 = vmatprep.subr.mxu0 0.0
    %198 = vmatpush1.msra.mxu0 0.0
    %199 = vmatprep.subr.mxu0 0.0
    %200 = vmatpush1.msra.mxu0 0.0
    %201 = vmatprep.subr.mxu0 0.0
    %202 = vmatpush1.msra.mxu0 0.0
    %203 = vmatprep.subr.mxu0 0.0
    %204 = vmatpush1.msra.mxu0 0.0
    %205 = vmatprep.subr.mxu0 0.0
    %206 = vmatpush1.msra.mxu0 0.0
    %207 = vmatprep.subr.mxu0 0.0
    %208 = vmatpush1.msra.mxu0 0.0
    %209 = vmatprep.subr.mxu0 0.0
    %210 = vmatpush1.msra.mxu0 0.0
    %211 = vmatprep.subr.mxu0 0.0
    %212 = vmatpush1.msra.mxu0 0.0
    %213 = vmatprep.subr.mxu0 0.0
    %214 = vmatpush1.msra.mxu0 0.0
    %215 = vmatprep.subr.mxu0 0.0
    %216 = vmatpush1.msra.mxu0 0.0
    %217 = vmatprep.subr.mxu0 0.0
    %218 = vmatpush1.msra.mxu0 0.0
    %219 = vmatprep.subr.mxu0 0.0
    %220 = vmatpush1.msra.mxu0 0.0
    %221 = vmatprep.subr.mxu0 0.0
    %222 = vmatpush1.msra.mxu0 0.0
    %223 = vmatprep.subr.mxu0 0.0
    %224 = vmatpush1.msra.mxu0 0.0
    %225 = vmatprep.subr.mxu0 0.0
    %226 = vmatpush1.msra.mxu0 0.0
    %227 = vmatprep.subr.mxu0 0.0
    %228 = vmatpush1.msra.mxu0 0.0
    %229 = vmatprep.subr.mxu0 0.0
    %230 = vmatpush1.msra.mxu0 0.0
    %231 = vmatprep.subr.mxu0 0.0
    %232 = vmatpush1.msra.mxu0 0.0
    %233 = vmatprep.subr.mxu0 0.0
    %234 = vmatpush1.msra.mxu0 0.0
    %235 = vmatprep.subr.mxu0 0.0
    %236 = vmatpush1.msra.mxu0 0.0
    %237 = vmatprep.subr.mxu0 0.0
    %238 = vmatpush1.msra.mxu0 0.0
    %239 = vmatprep.subr.mxu0 0.0
    %240 = vmatpush1.msra.mxu0 0.0
    %241 = vmatprep.subr.mxu0 0.0
    %242 = vmatpush1.msra.mxu0 0.0
    %243 = vmatprep.mubr.f32.mxu0 0.0
    %244 = vmatmul.mubr.f32.gmra.mrb[0].mxu0 %v177
    %v245 = vpop.f32.mrb[0].mxu0
    %v246 = vadd.f32 %v154, %v245
    %v247 = vpop.f32.mrb[0].mxu0
    %248 = vdwg.mxu0
    %v249 = vmax.f32 %v246, 0.0
    %v250 = vld [vmem:[#allocation7] sm:$0xff]
    %v251 = vld [vmem:[#allocation7 + $0x8] sm:$0xff]
    %v252 = vld [vmem:[#allocation7 + $0x10] sm:$0xff]
    %v253 = vld [vmem:[#allocation7 + $0x18] sm:$0xff]
    %v254 = vld [vmem:[%s5] sm:$0x1]
    %v256 = vlaneseq
    %v257 = vshrl.u32 %v256, 7
    %v258 = vsub.s32 0, %v257
    %v259 = vrot.slane %v254, %v258
    %262 = vrot.lane.b32.xlu0 %v249, 64
    %v263 = vpop.permute.xlu0 %262
    %v264 = vsel %vm95, %v263, 0
    %266 = vmatprep.subr.mxu0 0.0
    %267 = vmatpush1.msra.mxu0 %v250
    %268 = vmatprep.subr.mxu0 0.0
    %269 = vmatpush1.msra.mxu0 %v251
    %270 = vmatprep.subr.mxu0 0.0
    %271 = vmatpush1.msra.mxu0 %v252
    %272 = vmatprep.subr.mxu0 0.0
    %273 = vmatpush1.msra.mxu0 %v253
    %274 = vmatprep.subr.mxu0 0.0
    %275 = vmatpush1.msra.mxu0 0.0
    %276 = vmatprep.subr.mxu0 0.0
    %277 = vmatpush1.msra.mxu0 0.0
    %278 = vmatprep.subr.mxu0 0.0
    %279 = vmatpush1.msra.mxu0 0.0
    %280 = vmatprep.subr.mxu0 0.0
    %281 = vmatpush1.msra.mxu0 0.0
    %282 = vmatprep.subr.mxu0 0.0
    %283 = vmatpush1.msra.mxu0 0.0
    %284 = vmatprep.subr.mxu0 0.0
    %285 = vmatpush1.msra.mxu0 0.0
    %286 = vmatprep.subr.mxu0 0.0
    %287 = vmatpush1.msra.mxu0 0.0
    %288 = vmatprep.subr.mxu0 0.0
    %289 = vmatpush1.msra.mxu0 0.0
    %290 = vmatprep.subr.mxu0 0.0
    %291 = vmatpush1.msra.mxu0 0.0
    %292 = vmatprep.subr.mxu0 0.0
    %293 = vmatpush1.msra.mxu0 0.0
    %294 = vmatprep.subr.mxu0 0.0
    %295 = vmatpush1.msra.mxu0 0.0
    %296 = vmatprep.subr.mxu0 0.0
    %297 = vmatpush1.msra.mxu0 0.0
    %298 = vmatprep.subr.mxu0 0.0
    %299 = vmatpush1.msra.mxu0 0.0
    %300 = vmatprep.subr.mxu0 0.0
    %301 = vmatpush1.msra.mxu0 0.0
    %302 = vmatprep.subr.mxu0 0.0
    %303 = vmatpush1.msra.mxu0 0.0
    %304 = vmatprep.subr.mxu0 0.0
    %305 = vmatpush1.msra.mxu0 0.0
    %306 = vmatprep.subr.mxu0 0.0
    %307 = vmatpush1.msra.mxu0 0.0
    %308 = vmatprep.subr.mxu0 0.0
    %309 = vmatpush1.msra.mxu0 0.0
    %310 = vmatprep.subr.mxu0 0.0
    %311 = vmatpush1.msra.mxu0 0.0
    %312 = vmatprep.subr.mxu0 0.0
    %313 = vmatpush1.msra.mxu0 0.0
    %314 = vmatprep.subr.mxu0 0.0
    %315 = vmatpush1.msra.mxu0 0.0
    %316 = vmatprep.subr.mxu0 0.0
    %317 = vmatpush1.msra.mxu0 0.0
    %318 = vmatprep.subr.mxu0 0.0
    %319 = vmatpush1.msra.mxu0 0.0
    %320 = vmatprep.subr.mxu0 0.0
    %321 = vmatpush1.msra.mxu0 0.0
    %322 = vmatprep.subr.mxu0 0.0
    %323 = vmatpush1.msra.mxu0 0.0
    %324 = vmatprep.subr.mxu0 0.0
    %325 = vmatpush1.msra.mxu0 0.0
    %326 = vmatprep.subr.mxu0 0.0
    %327 = vmatpush1.msra.mxu0 0.0
    %328 = vmatprep.subr.mxu0 0.0
    %329 = vmatpush1.msra.mxu0 0.0
    %330 = vmatprep.mubr.f32.mxu0 0.0
    %331 = vmatmul.mubr.f32.gmra.mrb[0].mxu0 %v264
    %v332 = vpop.f32.mrb[0].mxu0
    %v333 = vadd.f32 %v259, %v332
    %v334 = vpop.f32.mrb[0].mxu0
    %335 = vdwg.mxu0
    %v336 = vadd.f32 %v333, %v246
    %v338 = vcombine.high %v336, %v336
    %v340 = vunpack.c.l.s4 1983009808
    %v341 = vunpack.c.0.s8 %v340
    %v342 = vlaneseq
    %v343 = vshrl.u32 %v342, 7
    %v344 = vsub.s32 %v341, %v343
    %v345 = vrot.slane %v336, %v344
    %v347 = vunpack.c.l.s4 1983009808
    %v348 = vunpack.c.0.s8 %v347
    %v349 = vlaneseq
    %v350 = vshrl.u32 %v349, 7
    %v351 = vsub.s32 %v348, %v350
    %v352 = vrot.slane %v338, %v351
    %v353 = vcombine.high %v345, %v345
    %v354 = vcombine.high %v352, %v352
    %v359 = vld [vmem:[%s0] sm:$0x3]
    %vm360 = vcmp.gt.s32.totalorder %v359, 0
    %vm361 = vcmp.gt.s32.totalorder %v359, 1
    %vm362 = vcmp.gt.s32.totalorder %v359, 2
    %vm363 = vcmp.gt.s32.totalorder %v359, 3
    %v364 = vsel %vm360, 1, 0
    %v365 = vsel %vm361, 1, 0
    %v366 = vsel %vm362, 1, 0
    %v367 = vsel %vm363, 1, 0
    %368 = vset.pattern.permute.xlu0 0
    %369 = vperm.xlu0 %368, %v364
    %v370 = vpop.permute.xlu0 %369
    %371 = vset.pattern.permute.xlu0 0
    %372 = vperm.xlu0 %371, %v365
    %v373 = vpop.permute.xlu0 %372
    %374 = vset.pattern.permute.xlu0 0
    %375 = vperm.xlu0 %374, %v366
    %v376 = vpop.permute.xlu0 %375
    %377 = vset.pattern.permute.xlu0 0
    %378 = vperm.xlu0 %377, %v367
    %v379 = vpop.permute.xlu0 %378
    %vm380 = vcmp.eq.s32.totalorder %v370, 1
    %vm381 = vcmp.eq.s32.totalorder %v373, 1
    %vm382 = vcmp.eq.s32.totalorder %v376, 1
    %vm383 = vcmp.eq.s32.totalorder %v379, 1
    %v384 = vsel %vm380, %v345, -inf
    %v385 = vsel %vm381, %v353, -inf
    %v386 = vsel %vm382, %v352, -inf
    %v387 = vsel %vm383, %v354, -inf
    %vm388 = vcmask 517120
    %v389 = vsel %vm388, %v384, -inf
    %v390 = vsel %vm388, %v385, -inf
    %v391 = vsel %vm388, %v386, -inf
    %v392 = vsel %vm388, %v387, -inf
    %v393 = vmax.f32 %v389, %v390
    %v394 = vmax.f32 %v391, %v392
    %v395 = vmax.f32 %v393, %v394
    %396 = vst.msk [vmem:[#allocation8] sm:$0x3] %vm388, %v395
    // Predicated region
    $region38: #{tpu_custom_call.1} parent=1 // pred_check
      _
    $region39: #{tpu_custom_call.1} parent=1 // pred_check_branch
      %398 = sbr.rel (0) target = $region41
    $region40: #{tpu_custom_call.1} parent=1 // pred_region
      %s400 = ssub.s32 32, 32
      %401 = vsyncadd [#allocation4], %s400
      %s403 = sshll.u32 [#allocation8], 4
      %s404 = int_to_ptr.vmem [resolvable:$true] %s403
      %406 = dma.vmem_to_hbm [thread:$0]  %s404, 32, %s6, [#allocation4]
    $region41: #{tpu_custom_call.1} parent=1 // pred_fallthru
      _
    // Predicated region
    $region42: #{tpu_custom_call.1} parent=1 // pred_check
      _
    $region43: #{tpu_custom_call.1} parent=1 // pred_check_branch
      %408 = sbr.rel (0) target = $region45
    $region44: #{tpu_custom_call.1} parent=1 // pred_region
      %409 = dma.done [#allocation4], 32
    $region45: #{tpu_custom_call.1} parent=1 // pred_fallthru
      _
    %410 = vsyncpa [#allocation3], 1
    %411 = vsyncpa [#allocation6], 1
    %412 = vsyncpa [#allocation4], 1

</llo_original>
